<compile_context>
chip_gen: v7x
topology: tpu7x:2x2x1
jax: 0.10.0
libtpu: 0.0.40
codegen_flags: <defaults>
</compile_context>

<pallas_src>
import functools

import jax
import jax.numpy as jnp
from jax.experimental import pallas as pl
from jax.experimental.pallas import tpu as pltpu

_MIB = 1024 * 1024


# ---------------------------------------------------------------------------
# Kernel
# ---------------------------------------------------------------------------
def _ffn_kernel(x_ref, w13_ref, w2_ref, o_ref, acc_ref, *, tn):
    # x_ref   : (tm, dim)        token tile, resident across the hidden loop
    # w13_ref : (dim, 2*tn)      k-th hidden slice of fused [W1^T | W3^T]
    # w2_ref  : (tn, dim)        k-th hidden slice of W2^T
    # o_ref   : (tm, dim)        output tile (written once, at the last k)
    # acc_ref : (tm, dim) f32    VMEM accumulator over the hidden axis
    k = pl.program_id(1)

    @pl.when(k == 0)
    def _():
        acc_ref[...] = jnp.zeros_like(acc_ref)

    x = x_ref[...]
    # One fused MXU call for both up-projections (single weight DMA stream).
    h = jnp.dot(x, w13_ref[...], preferred_element_type=jnp.float32)  # (tm, 2*tn)
    h1 = h[:, :tn]
    h3 = h[:, tn:]
    gated = (h1 * jax.nn.sigmoid(h1)) * h3  # silu(h1) * h3, f32 vregs
    acc_ref[...] += jnp.dot(gated.astype(w2_ref.dtype), w2_ref[...],
                            preferred_element_type=jnp.float32)

    @pl.when(k == pl.num_programs(1) - 1)
    def _():
        o_ref[...] = acc_ref[...].astype(o_ref.dtype)


# ---------------------------------------------------------------------------
# Generation / VMEM helpers
# ---------------------------------------------------------------------------
def _tpu_generation():
    try:
        kind = jax.devices()[0].device_kind.lower()
    except Exception:
        kind = ""
    if "v7" in kind:
        return "v7"
    if "v6" in kind:
        return "v6"
    if "v5" in kind:
        return "v5"
    return "v6"


def _vmem_capacity_bytes(gen):
    try:
        return int(pltpu.get_tpu_info().vmem_capacity_bytes)
    except Exception:
        # v7x: 64 MiB per TensorCore; v5e / v6e: 128 MiB.
        return (64 if gen == "v7" else 128) * _MIB


def _ffn_vmem_bytes(tm, tn, dim, x_bytes, w_bytes, out_bytes):
    """Working set of one grid step: double-buffered weight/x/out tiles,
    the f32 accumulator scratch, and the h / gated MXU-result temporaries."""
    weights = 2 * (dim * 2 * tn + tn * dim) * w_bytes  # W13 + W2 slices, 2x buffered
    xio = 2 * tm * dim * (x_bytes + out_bytes)         # x / out tiles, 2x buffered
    acc = 4 * tm * dim                                 # f32 accumulator scratch
    interm = 12 * tm * tn                              # h (f32, 2*tn) + gated copies
    return weights + xio + acc + interm


def _tile_candidates(total, aligns, preferred):
    """Divisors of `total` that are multiples of one of `aligns`, capped at
    `preferred`, sorted descending; falls back to [total]."""
    cands = set()
    hi = min(total, preferred)
    for a in aligns:
        t = a
        while t <= hi:
            if total % t == 0:
                cands.add(t)
            t += a
    if total <= preferred:
        cands.add(total)
    if not cands:
        cands.add(total)
    return sorted(cands, reverse=True)


def pick_hidden_tile(dim, hidden, x_dtype, w_dtype, *, gen=None):
    """Generation-aware hidden (reduction) tile.  Decided once at model-init
    time because the fused W13 layout is blocked by this tile."""
    gen = gen or _tpu_generation()
    budget = int(0.80 * _vmem_capacity_bytes(gen))
    # 256-wide MXU on v6e/v7x -> prefer 512/256 alignment; 128x128 MXU on v5e.
    aligns = (512, 256, 128) if gen in ("v6", "v7") else (256, 128)
    pref = 1024 if gen == "v7" else 2048
    tm_assumed = 512 if gen in ("v6", "v7") else 256
    xb = jnp.dtype(x_dtype).itemsize
    wb = jnp.dtype(w_dtype).itemsize
    cands = _tile_candidates(hidden, aligns, pref)
    for tn in cands:
        if _ffn_vmem_bytes(tm_assumed, tn, dim, xb, wb, xb) <= budget:
            return tn
    return cands[-1]


def _pick_token_tile(S, dim, tn, x_dtype, w_dtype, gen, budget):
    # Arithmetic intensity on the streamed weights is ~tm FLOP/byte (bf16):
    # v6e/v7x need ~600+ to be MXU-bound, v5e ~240 -> bigger tm on v6e/v7x.
    pref = 1024 if gen in ("v6", "v7") else 256
    aligns = (512, 256, 128, 8) if gen in ("v6", "v7") else (256, 128, 8)
    xb = jnp.dtype(x_dtype).itemsize
    wb = jnp.dtype(w_dtype).itemsize
    cands = _tile_candidates(S, aligns, pref)
    tm = cands[-1]
    for c in cands:
        if _ffn_vmem_bytes(c, tn, dim, xb, wb, xb) <= budget:
            tm = c
            break
    if gen == "v7" and S // tm < 2:
        # v7x has 2 TensorCores: give the "parallel" token axis >= 2 steps
        # when S allows, otherwise the second core idles.
        for c in cands:
            if c < tm and S // c >= 2:
                tm = c
                break
        # TODO(synk): for tiny-S decode (S < 16) split the hidden reduction
        # across cores (core_map / CORE_PARALLEL) instead.
    return tm


# ---------------------------------------------------------------------------
# Model-init time weight re-layout (one-off, not per call)
# ---------------------------------------------------------------------------
def prepare_ffn_weights(w1_weight, w2_weight, w3_weight, *, tn=None, dtype=None):
    """Fuse W1^T / W3^T into one column-block-interleaved (dim, 2*hidden)
    array so the k-th (dim, 2*tn) slab holds the k-th hidden slice of BOTH
    up-projections -> one weight DMA stream + one fused MXU call per step.

    PyTorch nn.Linear layouts in:  w1/w3 (hidden, dim), w2 (dim, hidden).
    Returns (w13, w2_t, tn).
    """
    hidden, dim = w1_weight.shape
    if dtype is not None:
        w1_weight = w1_weight.astype(dtype)
        w2_weight = w2_weight.astype(dtype)
        w3_weight = w3_weight.astype(dtype)
    if tn is None:
        tn = pick_hidden_tile(dim, hidden, w1_weight.dtype, w1_weight.dtype)
    assert hidden % tn == 0
    nk = hidden // tn
    w1_blk = w1_weight.T.reshape(dim, nk, tn)
    w3_blk = w3_weight.T.reshape(dim, nk, tn)
    w13 = jnp.concatenate([w1_blk, w3_blk], axis=-1).reshape(dim, 2 * hidden)
    w2_t = jnp.asarray(w2_weight.T)  # (hidden, dim)
    return jnp.asarray(w13), w2_t, tn


# ---------------------------------------------------------------------------
# Forward
# ---------------------------------------------------------------------------
@functools.partial(jax.jit, static_argnames=("tn", "tm"))
def feed_forward(x, w13, w2_t, *, tn, tm=None):
    """SwiGLU FFN:  (silu(x @ W1^T) * (x @ W3^T)) @ W2^T.

    x    : (S, dim)
    w13  : (dim, 2*hidden)  fused [W1^T | W3^T], column-blocked by `tn`
    w2_t : (hidden, dim)    == w2.weight.T
    tn   : hidden tile the fused layout was built with (static)
    """
    S, dim = x.shape
    hidden = w2_t.shape[0]
    assert w13.shape == (dim, 2 * hidden)
    assert hidden % tn == 0

    gen = _tpu_generation()
    cap_bytes = _vmem_capacity_bytes(gen)
    budget = int(0.80 * cap_bytes)
    if tm is None:
        tm = _pick_token_tile(S, dim, tn, x.dtype, w13.dtype, gen, budget)
    assert S % tm == 0

    xb = jnp.dtype(x.dtype).itemsize
    wb = jnp.dtype(w13.dtype).itemsize
    est = _ffn_vmem_bytes(tm, tn, dim, xb, wb, xb)
    vmem_limit = int(min(max(est + 8 * _MIB, 32 * _MIB), int(0.94 * cap_bytes)))

    grid = (S // tm, hidden // tn)
    kernel = functools.partial(_ffn_kernel, tn=tn)
    # NOTE: if a v5e profile shows the weight DMA exposed at the k boundary,
    # add pipeline_mode=pl.Buffered(3) to the weight BlockSpecs (budget first).
    return pl.pallas_call(
        kernel,
        out_shape=jax.ShapeDtypeStruct((S, dim), x.dtype),
        grid_spec=pltpu.PrefetchScalarGridSpec(
            num_scalar_prefetch=0,
            grid=grid,
            in_specs=[
                pl.BlockSpec((tm, dim), lambda i, k: (i, 0)),       # x tile
                pl.BlockSpec((dim, 2 * tn), lambda i, k: (0, k)),   # fused W1|W3 slice
                pl.BlockSpec((tn, dim), lambda i, k: (k, 0)),       # W2^T slice
            ],
            out_specs=pl.BlockSpec((tm, dim), lambda i, k: (i, 0)),
            scratch_shapes=[pltpu.VMEM((tm, dim), jnp.float32)],
        ),
        compiler_params=pltpu.CompilerParams(
            dimension_semantics=("parallel", "arbitrary"),
            vmem_limit_bytes=vmem_limit,
        ),
    )(x, w13, w2_t)


def _reference(x, w1_weight, w2_weight, w3_weight):
    h1 = x @ w1_weight.T
    h3 = x @ w3_weight.T
    g = (h1 * jax.nn.sigmoid(h1)) * h3
    return g @ w2_weight.T


if __name__ == "__main__":
    # Mirror the PyTorch __init__ hidden_dim computation.
    dim = 128
    hidden_dim_arg = 512
    multiple_of = 128
    ffn_dim_multiplier = None

    hidden_dim = int(2 * hidden_dim_arg / 3)
    if ffn_dim_multiplier is not None:
        hidden_dim = int(ffn_dim_multiplier * hidden_dim)
    hidden_dim = multiple_of * ((hidden_dim + multiple_of - 1) // multiple_of)  # -> 384

    seq = 16
    key = jax.random.PRNGKey(0)
    kx, k1, k2, k3 = jax.random.split(key, 4)

    x = jax.random.normal(kx, (seq, dim), dtype=jnp.float32)
    # PyTorch nn.Linear weight shapes: (out_features, in_features)
    w1_weight = jax.random.normal(k1, (hidden_dim, dim), dtype=jnp.float32) * 0.05
    w2_weight = jax.random.normal(k2, (dim, hidden_dim), dtype=jnp.float32) * 0.05
    w3_weight = jax.random.normal(k3, (hidden_dim, dim), dtype=jnp.float32) * 0.05

    ref = _reference(x, w1_weight, w2_weight, w3_weight)

    # --- f32 path, small explicit tiles so both grid axes are exercised -----
    # (2 token tiles x 3 hidden-reduction steps at these demo shapes)
    w13_f32, w2t_f32, tn_f32 = prepare_ffn_weights(
        w1_weight, w2_weight, w3_weight, tn=128)
    out_f32 = feed_forward(x, w13_f32, w2t_f32, tn=tn_f32, tm=8)
    out_f32 = jax.block_until_ready(out_f32)
    assert out_f32.shape == (seq, dim)
    assert jnp.allclose(out_f32, ref, atol=2e-4, rtol=2e-4)

    # --- bf16 production path: auto token tile, bf16 MXU operands -----------
    w13_bf, w2t_bf, tn_bf = prepare_ffn_weights(
        w1_weight, w2_weight, w3_weight, tn=128, dtype=jnp.bfloat16)
    out_bf = feed_forward(x.astype(jnp.bfloat16), w13_bf, w2t_bf, tn=tn_bf)
    out_bf = jax.block_until_ready(out_bf).astype(jnp.float32)
    assert out_bf.shape == (seq, dim)
    assert jnp.allclose(out_bf, ref, atol=1e-1, rtol=5e-2)

    print("KERNEL_OK")
</pallas_src>

<mosaic_0001>
module attributes {stable_mosaic.version = 11 : i64} {
  func.func @_ffn_kernel(%arg0: i32, %arg1: i32, %arg2: memref<8x128xf32, #tpu.memory_space<vmem>>, %arg3: memref<128x256xf32, #tpu.memory_space<vmem>>, %arg4: memref<128x128xf32, #tpu.memory_space<vmem>>, %arg5: memref<8x128xf32, #tpu.memory_space<vmem>>, %arg6: memref<8x128xf32, #tpu.memory_space<vmem>>) attributes {dimension_semantics = [#tpu.dimension_semantics<parallel>, #tpu.dimension_semantics<arbitrary>], iteration_bounds = array<i64: 2, 3>, scalar_prefetch = 0 : i64, scratch_operands = 1 : i64, tpu.core_type = #tpu.core_type<tc>, window_params = [{transform_indices = @transform_0, window_bounds = array<i64: 8, 128>}, {transform_indices = @transform_1, window_bounds = array<i64: 128, 256>}, {transform_indices = @transform_2, window_bounds = array<i64: 128, 128>}, {transform_indices = @transform_3, window_bounds = array<i64: 8, 128>}]} {
    %c0_i32 = arith.constant 0 : i32
    %0 = arith.cmpi eq, %arg1, %c0_i32 : i32
    %1 = arith.extui %0 : i1 to i32
    %c0_i32_0 = arith.constant 0 : i32
    %2 = arith.cmpi ne, %1, %c0_i32_0 : i32
    scf.if %2 {
      %cst_13 = arith.constant 0.000000e+00 : f32
      %23 = vector.broadcast %cst_13 : f32 to vector<8x128xf32>
      %c0_14 = arith.constant 0 : index
      %c0_15 = arith.constant 0 : index
      %24 = vector.load %arg6[%c0_14, %c0_15] : memref<8x128xf32, #tpu.memory_space<vmem>>, vector<8x128xf32>
      tpu.vector_store %arg6[%c0_14, %c0_15], %23 {strides = array<i32>} : memref<8x128xf32, #tpu.memory_space<vmem>>, vector<8x128xf32>,
    } else {
    }
    %c0 = arith.constant 0 : index
    %c0_1 = arith.constant 0 : index
    %3 = vector.load %arg2[%c0, %c0_1] : memref<8x128xf32, #tpu.memory_space<vmem>>, vector<8x128xf32>
    %c0_2 = arith.constant 0 : index
    %c0_3 = arith.constant 0 : index
    %4 = vector.load %arg3[%c0_2, %c0_3] : memref<128x256xf32, #tpu.memory_space<vmem>>, vector<128x256xf32>
    %cst = arith.constant dense<0.000000e+00> : vector<8x256xf32>
    %5 = tpu.matmul %3, %4, %cst {dimension_numbers = #tpu.dot_dimension_numbers<[1], [0], [0], [1], [0, 0, 1, 1], [], []>} : vector<8x128xf32>, vector<128x256xf32>, vector<8x256xf32> -> vector<8x256xf32>
    %6 = vector.extract_strided_slice %5 {offsets = [0, 0], sizes = [8, 128], strides = [1, 1]} : vector<8x256xf32> to vector<8x128xf32>
    %7 = vector.extract_strided_slice %5 {offsets = [0, 128], sizes = [8, 128], strides = [1, 1]} : vector<8x256xf32> to vector<8x128xf32>
    %8 = arith.negf %6 : vector<8x128xf32>
    %9 = math.exp %8 : vector<8x128xf32>
    %cst_4 = arith.constant 1.000000e+00 : f32
    %10 = vector.broadcast %cst_4 : f32 to vector<8x128xf32>
    %11 = arith.addf %10, %9 : vector<8x128xf32>
    %12 = arith.divf %10, %11 : vector<8x128xf32>
    %13 = arith.mulf %6, %12 : vector<8x128xf32>
    %14 = arith.mulf %13, %7 : vector<8x128xf32>
    %c0_5 = arith.constant 0 : index
    %c0_6 = arith.constant 0 : index
    %15 = vector.load %arg6[%c0_5, %c0_6] : memref<8x128xf32, #tpu.memory_space<vmem>>, vector<8x128xf32>
    %c0_7 = arith.constant 0 : index
    %c0_8 = arith.constant 0 : index
    %16 = vector.load %arg4[%c0_7, %c0_8] : memref<128x128xf32, #tpu.memory_space<vmem>>, vector<128x128xf32>
    %cst_9 = arith.constant dense<0.000000e+00> : vector<8x128xf32>
    %17 = tpu.matmul %14, %16, %cst_9 {dimension_numbers = #tpu.dot_dimension_numbers<[1], [0], [0], [1], [0, 0, 1, 1], [], []>} : vector<8x128xf32>, vector<128x128xf32>, vector<8x128xf32> -> vector<8x128xf32>
    %18 = arith.addf %15, %17 : vector<8x128xf32>
    %c0_10 = arith.constant 0 : index
    %c0_11 = arith.constant 0 : index
    %19 = vector.load %arg6[%c0_10, %c0_11] : memref<8x128xf32, #tpu.memory_space<vmem>>, vector<8x128xf32>
    tpu.vector_store %arg6[%c0_10, %c0_11], %18 {strides = array<i32>} : memref<8x128xf32, #tpu.memory_space<vmem>>, vector<8x128xf32>,
    %c2_i32 = arith.constant 2 : i32
    %20 = arith.cmpi eq, %arg1, %c2_i32 : i32
    %21 = arith.extui %20 : i1 to i32
    %c0_i32_12 = arith.constant 0 : i32
    %22 = arith.cmpi ne, %21, %c0_i32_12 : i32
    scf.if %22 {
      %c0_13 = arith.constant 0 : index
      %c0_14 = arith.constant 0 : index
      %23 = vector.load %arg6[%c0_13, %c0_14] : memref<8x128xf32, #tpu.memory_space<vmem>>, vector<8x128xf32>
      %c0_15 = arith.constant 0 : index
      %c0_16 = arith.constant 0 : index
      %24 = vector.load %arg5[%c0_15, %c0_16] : memref<8x128xf32, #tpu.memory_space<vmem>>, vector<8x128xf32>
      tpu.vector_store %arg5[%c0_15, %c0_16], %23 {strides = array<i32>} : memref<8x128xf32, #tpu.memory_space<vmem>>, vector<8x128xf32>,
    } else {
    }
    return
  }
  func.func @transform_0(%arg0: i32, %arg1: i32) -> (i32, i32) {
    %c0_i32 = arith.constant 0 : i32
    %c0_i32_0 = arith.constant 0 : i32
    return %arg0, %c0_i32 : i32, i32
  }
  func.func @transform_1(%arg0: i32, %arg1: i32) -> (i32, i32) {
    %c0_i32 = arith.constant 0 : i32
    %c0_i32_0 = arith.constant 0 : i32
    return %c0_i32, %arg1 : i32, i32
  }
  func.func @transform_2(%arg0: i32, %arg1: i32) -> (i32, i32) {
    %c0_i32 = arith.constant 0 : i32
    %c0_i32_0 = arith.constant 0 : i32
    return %arg1, %c0_i32 : i32, i32
  }
  func.func @transform_3(%arg0: i32, %arg1: i32) -> (i32, i32) {
    %c0_i32 = arith.constant 0 : i32
    %c0_i32_0 = arith.constant 0 : i32
    return %arg0, %c0_i32 : i32, i32
  }
}

</mosaic_0001>

<llo_original>
// kernel: feed_forward.1
$region0: #{feed_forward.1}
  #allocation0 [shape = 'u32[]', space=smem, size = 0x4, offset = 0x4, fixed_abs, tag = 'smem constant byte address 0x4 - core index']
  #allocation1 [shape = 'u32[144,128]{1,0:T(1,128)}', space=vmem, size = 0x12000, scoped, tag = 'internal scratch']
  #allocation2 [shape = 'f32[8,128]{1,0:T(8,128)}', space=vmem, size = 0x1000, scoped, tag = 'scratch operand']
  %s0 = inlined_call_operand.hbm [shape: f32[16,128], index: 0, kind: input, shape index: {}]
  %s1 = inlined_call_operand.hbm [shape: f32[128,768], index: 1, kind: input, shape index: {}]
  %s2 = inlined_call_operand.hbm [shape: f32[384,128], index: 2, kind: input, shape index: {}]
  %s3 = inlined_call_operand.hbm [shape: f32[16,128], index: 3, kind: output, shape index: {}]
  %s4 = sld [smem:[#allocation0]]
  $region65: #{feed_forward.1} parent=0
    _
  %s6 = ssub.s32 1, %s4
  %s7 = scalar_select 0, %s6, %s4
  $region1: #{feed_forward.1} parent=0
    #allocation3 [shape = 'u8[8192]{0}', space=vmem, size = 0x2000, scoped, tag = 'input window, operand 0']
    #allocation4 [shape = 's32[2]{0}', space=sflag, size = 0x8, scoped, tag = 'scoped memory for feed_forward.1']
    #allocation5 [shape = 's32[2]{0}', space=sflag, size = 0x8, scoped, tag = 'scoped memory for feed_forward.1']
    #allocation6 [shape = 'u8[262144]{0}', space=vmem, size = 0x40000, scoped, tag = 'input window, operand 1']
    #allocation7 [shape = 's32[2]{0}', space=sflag, size = 0x8, scoped, tag = 'scoped memory for feed_forward.1']
    #allocation8 [shape = 'u8[131072]{0}', space=vmem, size = 0x20000, scoped, tag = 'input window, operand 2']
    #allocation9 [shape = 'u8[8192]{0}', space=vmem, size = 0x2000, scoped, tag = 'output window, operand 0']
    %8 = vsyncpa [#allocation4], 0
    %s9 = scalar_lea.sflag [#allocation4], 1
    %10 = vsyncpa %s9, 0
    %11 = vsyncpa [#allocation7], 0
    %s12 = scalar_lea.sflag [#allocation7], 1
    %13 = vsyncpa %s12, 0
    %14 = vsyncpa [#allocation5], 0
    %s15 = scalar_lea.sflag [#allocation5], 1
    %16 = vsyncpa %s15, 0
    loop: start=0, step=1, limit=8
    $region2: #{feed_forward.1} parent=1 // loop_pre_header
      _
    $region3: #{feed_forward.1} parent=1 // loop_header
      %s18 = sphi 0, %s22
      %p19 = scmp.ge.s32.totalorder %s18, 8
      %s25 = sphi 0, %s37
      %s26 = sphi 0, %s33
      %s27 = sphi 0, %s25
      %s28 = sphi 0, %s26
      %s29 = sphi 0, %s27
      %s30 = sphi 0, %s28
      %s40 = sphi 0, %s42
      %s43 = sphi 0, %s40
      %s44 = sphi 0, %s43
      %s60 = sphi 0, %s44
      %s66 = sphi 0, %s68
      %s69 = sphi 0, %s66
      %s70 = sphi 0, %s69
      %s86 = sphi 0, %s70
      %s92 = sphi 0, %s94
      %s95 = sphi 0, %s92
      %s96 = sphi 0, %s95
      %s112 = sphi 0, %s96
      %s118 = sphi 0, %s120
      %s121 = sphi 0, %s118
      %s122 = sphi 0, %s121
      %s138 = sphi 0, %s122
    $region4: #{feed_forward.1} parent=1 // loop_header_branch
      %21 = sbr.rel (%p19) target = $region8
    $region5: #{feed_forward.1} parent=1 // loop_body
      %s23 = ssub.s32 %s18, 1
      %s24 = ssub.s32 %s18, 2
      %s31 = sadd.s32 1, %s26
      %p32 = scmp.ge.s32.totalorder %s31, 3
      %s33 = scalar_select %p32, 0, %s31
      %s34 = sadd.s32 1, %s25
      %s35 = scalar_select %p32, %s34, %s25
      %p36 = scmp.ge.s32.totalorder %s35, 2
      %s37 = scalar_select %p36, 0, %s35
      %s38 = ssub.s32 %s25, %s37
      %p39 = scmp.eq.s32.totalorder %s38, 0
      %s41 = sadd.s32 %s40, 1
      %s42 = scalar_select %p39, %s40, %s41
      %p45 = pneg %p39
      %p46 = scmp.eq.s32.totalorder %s18, 5
      %p47 = por %p45, %p46
      %p48 = scmp.ne.s32.totalorder %s40, %s43
      %p49 = scmp.eq.s32.totalorder %s18, 0
      %p50 = por %p48, %p49
      %p51 = scmp.ne.s32.totalorder %s40, %s43
      %p52 = scmp.eq.s32.totalorder %s23, 5
      %p53 = por %p51, %p52
      %p54 = scmp.ne.s32.totalorder %s43, %s44
      %p55 = scmp.eq.s32.totalorder %s23, 0
      %p56 = por %p54, %p55
      %p57 = scmp.ne.s32.totalorder %s43, %s44
      %p58 = scmp.eq.s32.totalorder %s24, 5
      %p59 = por %p57, %p58
      %p61 = scmp.ne.s32.totalorder %s44, %s60
      %p62 = scmp.eq.s32.totalorder %s24, 0
      %p63 = por %p61, %p62
      %s64 = ssub.s32 %s26, %s33
      %p65 = scmp.eq.s32.totalorder %s64, 0
      %s67 = sadd.s32 %s66, 1
      %s68 = scalar_select %p65, %s66, %s67
      %p71 = pneg %p65
      %p72 = scmp.eq.s32.totalorder %s18, 5
      %p73 = por %p71, %p72
      %p74 = scmp.ne.s32.totalorder %s66, %s69
      %p75 = scmp.eq.s32.totalorder %s18, 0
      %p76 = por %p74, %p75
      %p77 = scmp.ne.s32.totalorder %s66, %s69
      %p78 = scmp.eq.s32.totalorder %s23, 5
      %p79 = por %p77, %p78
      %p80 = scmp.ne.s32.totalorder %s69, %s70
      %p81 = scmp.eq.s32.totalorder %s23, 0
      %p82 = por %p80, %p81
      %p83 = scmp.ne.s32.totalorder %s69, %s70
      %p84 = scmp.eq.s32.totalorder %s24, 5
      %p85 = por %p83, %p84
      %p87 = scmp.ne.s32.totalorder %s70, %s86
      %p88 = scmp.eq.s32.totalorder %s24, 0
      %p89 = por %p87, %p88
      %s90 = ssub.s32 %s26, %s33
      %p91 = scmp.eq.s32.totalorder %s90, 0
      %s93 = sadd.s32 %s92, 1
      %s94 = scalar_select %p91, %s92, %s93
      %p97 = pneg %p91
      %p98 = scmp.eq.s32.totalorder %s18, 5
      %p99 = por %p97, %p98
      %p100 = scmp.ne.s32.totalorder %s92, %s95
      %p101 = scmp.eq.s32.totalorder %s18, 0
      %p102 = por %p100, %p101
      %p103 = scmp.ne.s32.totalorder %s92, %s95
      %p104 = scmp.eq.s32.totalorder %s23, 5
      %p105 = por %p103, %p104
      %p106 = scmp.ne.s32.totalorder %s95, %s96
      %p107 = scmp.eq.s32.totalorder %s23, 0
      %p108 = por %p106, %p107
      %p109 = scmp.ne.s32.totalorder %s95, %s96
      %p110 = scmp.eq.s32.totalorder %s24, 5
      %p111 = por %p109, %p110
      %p113 = scmp.ne.s32.totalorder %s96, %s112
      %p114 = scmp.eq.s32.totalorder %s24, 0
      %p115 = por %p113, %p114
      %s116 = ssub.s32 %s25, %s37
      %p117 = scmp.eq.s32.totalorder %s116, 0
      %s119 = sadd.s32 %s118, 1
      %s120 = scalar_select %p117, %s118, %s119
      %p123 = pneg %p117
      %p124 = scmp.eq.s32.totalorder %s18, 5
      %p125 = por %p123, %p124
      %p126 = scmp.ne.s32.totalorder %s118, %s121
      %p127 = scmp.eq.s32.totalorder %s18, 0
      %p128 = por %p126, %p127
      %p129 = scmp.ne.s32.totalorder %s118, %s121
      %p130 = scmp.eq.s32.totalorder %s23, 5
      %p131 = por %p129, %p130
      %p132 = scmp.ne.s32.totalorder %s121, %s122
      %p133 = scmp.eq.s32.totalorder %s23, 0
      %p134 = por %p132, %p133
      %p135 = scmp.ne.s32.totalorder %s121, %s122
      %p136 = scmp.eq.s32.totalorder %s24, 5
      %p137 = por %p135, %p136
      %p139 = scmp.ne.s32.totalorder %s122, %s138
      %p140 = scmp.eq.s32.totalorder %s24, 0
      %p141 = por %p139, %p140
      %p142 = scmp.le.s32.totalorder 1, %s18
      %p143 = scmp.lt.s32.totalorder %s18, 7
      %p144 = pnand %p142, %p143
      %p145 = pneg %p144
      // Predicated region
      $region9: #{feed_forward.1} parent=5 // pred_check
        _
      $region10: #{feed_forward.1} parent=5 // pred_check_branch
        %147 = sbr.rel (%p144) target = $region12
      $region11: #{feed_forward.1} parent=5 // pred_region
        %s148 = ssub.s32 %s18, 1
      $region12: #{feed_forward.1} parent=5 // pred_fallthru
        _
      %p149 = scmp.lt.s32.totalorder %s18, 6
      // Predicated region
      $region13: #{feed_forward.1} parent=5 // pred_check
        %p150 = pneg %p149
      $region14: #{feed_forward.1} parent=5 // pred_check_branch
        %152 = sbr.rel (%p150) target = $region16
      $region15: #{feed_forward.1} parent=5 // pred_region
        // Predicated region
        $region17: #{feed_forward.1} parent=15 // pred_check
          %p153 = pneg %p50
        $region18: #{feed_forward.1} parent=15 // pred_check_branch
          %155 = sbr.rel (%p153) target = $region20
        $region19: #{feed_forward.1} parent=15 // pred_region
          %s156 = sand.u32 %s40, 1
          %s157 = scalar_lea.sflag [#allocation4], %s156
          %s158 = sand.u32 %s40, 1
          %s159 = smul.addr %s158, 8
          %s160 = scalar_lea.vmem [#allocation3], %s159
          %s162 = ssub.s32 128, 128
          %163 = vsyncadd %s157, %s162
          %s164 = smul.addr %s25, 128
          %s165 = scalar_lea.hbm %s0, %s164
          %s167 = sshll.u32 %s160, 4
          %s168 = int_to_ptr.vmem [resolvable:$true] %s167
          %170 = dma.hbm_to_vmem [thread:$0]  %s165, 128, %s168, %s157
        $region20: #{feed_forward.1} parent=15 // pred_fallthru
          _
        // Predicated region
        $region21: #{feed_forward.1} parent=15 // pred_check
          %p171 = pneg %p76
        $region22: #{feed_forward.1} parent=15 // pred_check_branch
          %173 = sbr.rel (%p171) target = $region24
        $region23: #{feed_forward.1} parent=15 // pred_region
          %s174 = sand.u32 %s18, 1
          %s175 = scalar_lea.sflag [#allocation7], %s174
          %s176 = sand.u32 %s66, 1
          %s177 = smul.addr %s176, 256
          %s178 = scalar_lea.vmem [#allocation6], %s177
          %s179 = smul.u32 2, %s26
          %s181 = ssub.s32 4096, 4096
          %182 = vsyncadd %s175, %s181
          %s183 = smul.addr %s179, 128
          %s184 = scalar_lea.hbm %s1, %s183
          %s185 = sshll.u32 %s178, 4
          %s186 = int_to_ptr.vmem [resolvable:$true] %s185
          %191 = dma.hbm_to_vmem [thread:$0]  %s184, 4096, %s186, %s175, 768, 256, 16
        $region24: #{feed_forward.1} parent=15 // pred_fallthru
          _
        // Predicated region
        $region25: #{feed_forward.1} parent=15 // pred_check
          %p192 = pneg %p102
        $region26: #{feed_forward.1} parent=15 // pred_check_branch
          %194 = sbr.rel (%p192) target = $region28
        $region27: #{feed_forward.1} parent=15 // pred_region
          %s195 = sand.u32 %s18, 1
          %s196 = scalar_lea.sflag [#allocation7], %s195
          %s197 = sand.u32 %s92, 1
          %s198 = smul.addr %s197, 128
          %s199 = scalar_lea.vmem [#allocation8], %s198
          %s200 = smul.u32 16, %s26
          %s202 = ssub.s32 2048, 2048
          %203 = vsyncadd %s196, %s202
          %s204 = smul.addr %s200, 128
          %s205 = scalar_lea.hbm %s2, %s204
          %s206 = sshll.u32 %s199, 4
          %s207 = int_to_ptr.vmem [resolvable:$true] %s206
          %212 = dma.hbm_to_vmem [thread:$0]  %s205, 2048, %s207, %s196, 128, 128, 8
        $region28: #{feed_forward.1} parent=15 // pred_fallthru
          _
      $region16: #{feed_forward.1} parent=5 // pred_fallthru
        _
      %p213 = scmp.le.s32.totalorder 1, %s18
      %p214 = scmp.lt.s32.totalorder %s18, 7
      %p215 = pnand %p213, %p214
      %p216 = pneg %p215
      // Predicated region
      $region29: #{feed_forward.1} parent=5 // pred_check
        _
      $region30: #{feed_forward.1} parent=5 // pred_check_branch
        %218 = sbr.rel (%p215) target = $region32
      $region31: #{feed_forward.1} parent=5 // pred_region
        %s219 = ssub.s32 %s18, 1
        %s220 = sand.u32 %s43, 1
        %s221 = scalar_lea.sflag [#allocation4], %s220
        %s222 = sand.u32 %s43, 1
        %s223 = smul.addr %s222, 8
        %s224 = scalar_lea.vmem [#allocation3], %s223
        // Predicated region
        $region33: #{feed_forward.1} parent=31 // pred_check
          %p225 = pneg %p56
        $region34: #{feed_forward.1} parent=31 // pred_check_branch
          %227 = sbr.rel (%p225) target = $region36
        $region35: #{feed_forward.1} parent=31 // pred_region
          %228 = dma.done %s221, 128
        $region36: #{feed_forward.1} parent=31 // pred_fallthru
          _
        %s229 = sand.u32 %s23, 1
        %s230 = scalar_lea.sflag [#allocation7], %s229
        %s231 = sand.u32 %s69, 1
        %s232 = smul.addr %s231, 256
        %s233 = scalar_lea.vmem [#allocation6], %s232
        // Predicated region
        $region37: #{feed_forward.1} parent=31 // pred_check
          %p234 = pneg %p82
        $region38: #{feed_forward.1} parent=31 // pred_check_branch
          %236 = sbr.rel (%p234) target = $region40
        $region39: #{feed_forward.1} parent=31 // pred_region
          %237 = dma.done %s230, 4096
        $region40: #{feed_forward.1} parent=31 // pred_fallthru
          _
        %s238 = sand.u32 %s23, 1
        %s239 = scalar_lea.sflag [#allocation7], %s238
        %s240 = sand.u32 %s95, 1
        %s241 = smul.addr %s240, 128
        %s242 = scalar_lea.vmem [#allocation8], %s241
        // Predicated region
        $region41: #{feed_forward.1} parent=31 // pred_check
          %p243 = pneg %p108
        $region42: #{feed_forward.1} parent=31 // pred_check_branch
          %245 = sbr.rel (%p243) target = $region44
        $region43: #{feed_forward.1} parent=31 // pred_region
          %246 = dma.done %s239, 2048
        $region44: #{feed_forward.1} parent=31 // pred_fallthru
          _
        %s247 = sand.u32 %s43, 1
        %s248 = scalar_lea.sflag [#allocation4], %s247
        %s249 = sand.u32 %s43, 1
        %s250 = smul.addr %s249, 8
        %s251 = scalar_lea.vmem [#allocation3], %s250
        %p252 = pneg %p56
        %p253 = pneg %p53
        %s254 = sand.u32 %s23, 1
        %s255 = scalar_lea.sflag [#allocation7], %s254
        %s256 = sand.u32 %s69, 1
        %s257 = smul.addr %s256, 256
        %s258 = scalar_lea.vmem [#allocation6], %s257
        %p259 = pneg %p82
        %p260 = pneg %p79
        %s261 = sand.u32 %s23, 1
        %s262 = scalar_lea.sflag [#allocation7], %s261
        %s263 = sand.u32 %s95, 1
        %s264 = smul.addr %s263, 128
        %s265 = scalar_lea.vmem [#allocation8], %s264
        %p266 = pneg %p108
        %p267 = pneg %p105
        %p268 = pneg %p134
        %p269 = pneg %p131
        %s270 = sand.u32 %s121, 1
        %s271 = scalar_lea.sflag [#allocation5], %s270
        %s272 = sand.u32 %s121, 1
        %s273 = smul.addr %s272, 8
        %s274 = scalar_lea.vmem [#allocation9], %s273
        %s275 = smul.u32 2, %s28
        %s276 = smul.u32 16, %s28
        %p277 = scmp.eq.s32.totalorder %s28, 0
        // Predicated region
        $region45: #{feed_forward.1} parent=31 // pred_check
          %p278 = pneg %p277
        $region46: #{feed_forward.1} parent=31 // pred_check_branch
          %280 = sbr.rel (%p278) target = $region48
        $region47: #{feed_forward.1} parent=31 // pred_region
          %281 = vst [vmem:[#allocation2] sm:$0xff] 0.0
        $region48: #{feed_forward.1} parent=31 // pred_fallthru
          _
        %v282 = vld [vmem:[%s224] sm:$0xff]
        %v283 = vld [vmem:[%s233] sm:$0xff]
        %v284 = vld [vmem:[%s233 + $0x8] sm:$0xff]
        %v285 = vld [vmem:[%s233 + $0x10] sm:$0xff]
        %v286 = vld [vmem:[%s233 + $0x18] sm:$0xff]
        %v287 = vld [vmem:[%s233 + $0x20] sm:$0xff]
        %v288 = vld [vmem:[%s233 + $0x28] sm:$0xff]
        %v289 = vld [vmem:[%s233 + $0x30] sm:$0xff]
        %v290 = vld [vmem:[%s233 + $0x38] sm:$0xff]
        %v291 = vld [vmem:[%s233 + $0x40] sm:$0xff]
        %v292 = vld [vmem:[%s233 + $0x48] sm:$0xff]
        %v293 = vld [vmem:[%s233 + $0x50] sm:$0xff]
        %v294 = vld [vmem:[%s233 + $0x58] sm:$0xff]
        %v295 = vld [vmem:[%s233 + $0x60] sm:$0xff]
        %v296 = vld [vmem:[%s233 + $0x68] sm:$0xff]
        %v297 = vld [vmem:[%s233 + $0x70] sm:$0xff]
        %v298 = vld [vmem:[%s233 + $0x78] sm:$0xff]
        %v299 = vld [vmem:[%s233 + $0x80] sm:$0xff]
        %v300 = vld [vmem:[%s233 + $0x88] sm:$0xff]
        %v301 = vld [vmem:[%s233 + $0x90] sm:$0xff]
        %v302 = vld [vmem:[%s233 + $0x98] sm:$0xff]
        %v303 = vld [vmem:[%s233 + $0xa0] sm:$0xff]
        %v304 = vld [vmem:[%s233 + $0xa8] sm:$0xff]
        %v305 = vld [vmem:[%s233 + $0xb0] sm:$0xff]
        %v306 = vld [vmem:[%s233 + $0xb8] sm:$0xff]
        %v307 = vld [vmem:[%s233 + $0xc0] sm:$0xff]
        %v308 = vld [vmem:[%s233 + $0xc8] sm:$0xff]
        %v309 = vld [vmem:[%s233 + $0xd0] sm:$0xff]
        %v310 = vld [vmem:[%s233 + $0xd8] sm:$0xff]
        %v311 = vld [vmem:[%s233 + $0xe0] sm:$0xff]
        %v312 = vld [vmem:[%s233 + $0xe8] sm:$0xff]
        %v313 = vld [vmem:[%s233 + $0xf0] sm:$0xff]
        %v314 = vld [vmem:[%s233 + $0xf8] sm:$0xff]
        %315 = vmatprep.subr.mxu0 %v284
        %316 = vmatpush1.msra.mxu0 %v283
        %317 = vmatprep.subr.mxu0 %v286
        %318 = vmatpush1.msra.mxu0 %v285
        %319 = vmatprep.subr.mxu0 %v288
        %320 = vmatpush1.msra.mxu0 %v287
        %321 = vmatprep.subr.mxu0 %v290
        %322 = vmatpush1.msra.mxu0 %v289
        %323 = vmatprep.subr.mxu0 %v292
        %324 = vmatpush1.msra.mxu0 %v291
        %325 = vmatprep.subr.mxu0 %v294
        %326 = vmatpush1.msra.mxu0 %v293
        %327 = vmatprep.subr.mxu0 %v296
        %328 = vmatpush1.msra.mxu0 %v295
        %329 = vmatprep.subr.mxu0 %v298
        %330 = vmatpush1.msra.mxu0 %v297
        %331 = vmatprep.subr.mxu0 %v300
        %332 = vmatpush1.msra.mxu0 %v299
        %333 = vmatprep.subr.mxu0 %v302
        %334 = vmatpush1.msra.mxu0 %v301
        %335 = vmatprep.subr.mxu0 %v304
        %336 = vmatpush1.msra.mxu0 %v303
        %337 = vmatprep.subr.mxu0 %v306
        %338 = vmatpush1.msra.mxu0 %v305
        %339 = vmatprep.subr.mxu0 %v308
        %340 = vmatpush1.msra.mxu0 %v307
        %341 = vmatprep.subr.mxu0 %v310
        %342 = vmatpush1.msra.mxu0 %v309
        %343 = vmatprep.subr.mxu0 %v312
        %344 = vmatpush1.msra.mxu0 %v311
        %345 = vmatprep.subr.mxu0 %v314
        %346 = vmatpush1.msra.mxu0 %v313
        %347 = vmatprep.subr.mxu0 0.0
        %348 = vmatpush1.msra.mxu0 0.0
        %349 = vmatprep.subr.mxu0 0.0
        %350 = vmatpush1.msra.mxu0 0.0
        %351 = vmatprep.subr.mxu0 0.0
        %352 = vmatpush1.msra.mxu0 0.0
        %353 = vmatprep.subr.mxu0 0.0
        %354 = vmatpush1.msra.mxu0 0.0
        %355 = vmatprep.subr.mxu0 0.0
        %356 = vmatpush1.msra.mxu0 0.0
        %357 = vmatprep.subr.mxu0 0.0
        %358 = vmatpush1.msra.mxu0 0.0
        %359 = vmatprep.subr.mxu0 0.0
        %360 = vmatpush1.msra.mxu0 0.0
        %361 = vmatprep.subr.mxu0 0.0
        %362 = vmatpush1.msra.mxu0 0.0
        %363 = vmatprep.subr.mxu0 0.0
        %364 = vmatpush1.msra.mxu0 0.0
        %365 = vmatprep.subr.mxu0 0.0
        %366 = vmatpush1.msra.mxu0 0.0
        %367 = vmatprep.subr.mxu0 0.0
        %368 = vmatpush1.msra.mxu0 0.0
        %369 = vmatprep.subr.mxu0 0.0
        %370 = vmatpush1.msra.mxu0 0.0
        %371 = vmatprep.subr.mxu0 0.0
        %372 = vmatpush1.msra.mxu0 0.0
        %373 = vmatprep.subr.mxu0 0.0
        %374 = vmatpush1.msra.mxu0 0.0
        %375 = vmatprep.subr.mxu0 0.0
        %376 = vmatpush1.msra.mxu0 0.0
        %377 = vmatprep.subr.mxu0 0.0
        %378 = vmatpush1.msra.mxu0 0.0
        %379 = vmatprep.mubr.f32.mxu0 0.0
        %380 = vmatmul.mubr.f32.gmra.mrb[0].mxu0 %v282
        %v381 = vpop.f32.mrb[0].mxu0
        %v382 = vadd.f32 0.0, %v381
        %v383 = vpop.f32.mrb[0].mxu0
        %v384 = vadd.f32 0.0, %v383
        %385 = vdwg.mxu0
        %v386 = vxor.u32 %v382, 2147483648
        %v387 = vmul.f32 %v386, 1.442695
        %v388 = vpow.pop %v387
        %v389 = vadd.f32 %v388, 1.0
        %v390 = vrcp.pop %v389
        %v391 = vmul.f32 1.0, %v390
        %v392 = vmul.f32 %v382, %v391
        %v393 = vmul.f32 %v392, %v384
        %v394 = vld [vmem:[#allocation2] sm:$0xff]
        %v395 = vld [vmem:[%s242] sm:$0xff]
        %v396 = vld [vmem:[%s242 + $0x8] sm:$0xff]
        %v397 = vld [vmem:[%s242 + $0x10] sm:$0xff]
        %v398 = vld [vmem:[%s242 + $0x18] sm:$0xff]
        %v399 = vld [vmem:[%s242 + $0x20] sm:$0xff]
        %v400 = vld [vmem:[%s242 + $0x28] sm:$0xff]
        %v401 = vld [vmem:[%s242 + $0x30] sm:$0xff]
        %v402 = vld [vmem:[%s242 + $0x38] sm:$0xff]
        %v403 = vld [vmem:[%s242 + $0x40] sm:$0xff]
        %v404 = vld [vmem:[%s242 + $0x48] sm:$0xff]
        %v405 = vld [vmem:[%s242 + $0x50] sm:$0xff]
        %v406 = vld [vmem:[%s242 + $0x58] sm:$0xff]
        %v407 = vld [vmem:[%s242 + $0x60] sm:$0xff]
        %v408 = vld [vmem:[%s242 + $0x68] sm:$0xff]
        %v409 = vld [vmem:[%s242 + $0x70] sm:$0xff]
        %v410 = vld [vmem:[%s242 + $0x78] sm:$0xff]
        %411 = vmatprep.subr.mxu0 0.0
        %412 = vmatpush1.msra.mxu0 %v395
        %413 = vmatprep.subr.mxu0 0.0
        %414 = vmatpush1.msra.mxu0 %v396
        %415 = vmatprep.subr.mxu0 0.0
        %416 = vmatpush1.msra.mxu0 %v397
        %417 = vmatprep.subr.mxu0 0.0
        %418 = vmatpush1.msra.mxu0 %v398
        %419 = vmatprep.subr.mxu0 0.0
        %420 = vmatpush1.msra.mxu0 %v399
        %421 = vmatprep.subr.mxu0 0.0
        %422 = vmatpush1.msra.mxu0 %v400
        %423 = vmatprep.subr.mxu0 0.0
        %424 = vmatpush1.msra.mxu0 %v401
        %425 = vmatprep.subr.mxu0 0.0
        %426 = vmatpush1.msra.mxu0 %v402
        %427 = vmatprep.subr.mxu0 0.0
        %428 = vmatpush1.msra.mxu0 %v403
        %429 = vmatprep.subr.mxu0 0.0
        %430 = vmatpush1.msra.mxu0 %v404
        %431 = vmatprep.subr.mxu0 0.0
        %432 = vmatpush1.msra.mxu0 %v405
        %433 = vmatprep.subr.mxu0 0.0
        %434 = vmatpush1.msra.mxu0 %v406
        %435 = vmatprep.subr.mxu0 0.0
        %436 = vmatpush1.msra.mxu0 %v407
        %437 = vmatprep.subr.mxu0 0.0
        %438 = vmatpush1.msra.mxu0 %v408
        %439 = vmatprep.subr.mxu0 0.0
        %440 = vmatpush1.msra.mxu0 %v409
        %441 = vmatprep.subr.mxu0 0.0
        %442 = vmatpush1.msra.mxu0 %v410
        %443 = vmatprep.subr.mxu0 0.0
        %444 = vmatpush1.msra.mxu0 0.0
        %445 = vmatprep.subr.mxu0 0.0
        %446 = vmatpush1.msra.mxu0 0.0
        %447 = vmatprep.subr.mxu0 0.0
        %448 = vmatpush1.msra.mxu0 0.0
        %449 = vmatprep.subr.mxu0 0.0
        %450 = vmatpush1.msra.mxu0 0.0
        %451 = vmatprep.subr.mxu0 0.0
        %452 = vmatpush1.msra.mxu0 0.0
        %453 = vmatprep.subr.mxu0 0.0
        %454 = vmatpush1.msra.mxu0 0.0
        %455 = vmatprep.subr.mxu0 0.0
        %456 = vmatpush1.msra.mxu0 0.0
        %457 = vmatprep.subr.mxu0 0.0
        %458 = vmatpush1.msra.mxu0 0.0
        %459 = vmatprep.subr.mxu0 0.0
        %460 = vmatpush1.msra.mxu0 0.0
        %461 = vmatprep.subr.mxu0 0.0
        %462 = vmatpush1.msra.mxu0 0.0
        %463 = vmatprep.subr.mxu0 0.0
        %464 = vmatpush1.msra.mxu0 0.0
        %465 = vmatprep.subr.mxu0 0.0
        %466 = vmatpush1.msra.mxu0 0.0
        %467 = vmatprep.subr.mxu0 0.0
        %468 = vmatpush1.msra.mxu0 0.0
        %469 = vmatprep.subr.mxu0 0.0
        %470 = vmatpush1.msra.mxu0 0.0
        %471 = vmatprep.subr.mxu0 0.0
        %472 = vmatpush1.msra.mxu0 0.0
        %473 = vmatprep.subr.mxu0 0.0
        %474 = vmatpush1.msra.mxu0 0.0
        %475 = vmatprep.mubr.f32.mxu0 0.0
        %476 = vmatmul.mubr.f32.gmra.mrb[0].mxu0 %v393
        %v477 = vpop.f32.mrb[0].mxu0
        %v478 = vadd.f32 0.0, %v477
        %v479 = vpop.f32.mrb[0].mxu0
        %480 = vdwg.mxu0
        %v481 = vadd.f32 %v394, %v478
        %482 = vst [vmem:[#allocation2] sm:$0xff] %v481
        %p483 = scmp.eq.s32.totalorder %s28, 2
        // Predicated region
        $region49: #{feed_forward.1} parent=31 // pred_check
          %p484 = pneg %p483
        $region50: #{feed_forward.1} parent=31 // pred_check_branch
          %486 = sbr.rel (%p484) target = $region52
        $region51: #{feed_forward.1} parent=31 // pred_region
          %v487 = vld [vmem:[#allocation2] sm:$0xff]
          %488 = vst [vmem:[%s274] sm:$0xff] %v487
        $region52: #{feed_forward.1} parent=31 // pred_fallthru
          _
        %s489 = sand.u32 %s121, 1
        %s490 = scalar_lea.sflag [#allocation5], %s489
        %s491 = sand.u32 %s121, 1
        %s492 = smul.addr %s491, 8
        %s493 = scalar_lea.vmem [#allocation9], %s492
        // Predicated region
        $region53: #{feed_forward.1} parent=31 // pred_check
          %p494 = pneg %p131
        $region54: #{feed_forward.1} parent=31 // pred_check_branch
          %496 = sbr.rel (%p494) target = $region56
        $region55: #{feed_forward.1} parent=31 // pred_region
          %s498 = ssub.s32 128, 128
          %499 = vsyncadd %s490, %s498
          %s500 = smul.addr %s27, 128
          %s501 = scalar_lea.hbm %s3, %s500
          %s503 = sshll.u32 %s493, 4
          %s504 = int_to_ptr.vmem [resolvable:$true] %s503
          %506 = dma.vmem_to_hbm [thread:$0]  %s504, 128, %s501, %s490
        $region56: #{feed_forward.1} parent=31 // pred_fallthru
          _
      $region32: #{feed_forward.1} parent=5 // pred_fallthru
        _
      %p507 = scmp.le.s32.totalorder 2, %s18
      // Predicated region
      $region57: #{feed_forward.1} parent=5 // pred_check
        %p508 = pneg %p507
      $region58: #{feed_forward.1} parent=5 // pred_check_branch
        %510 = sbr.rel (%p508) target = $region60
      $region59: #{feed_forward.1} parent=5 // pred_region
        %s511 = ssub.s32 %s18, 2
        // Predicated region
        $region61: #{feed_forward.1} parent=59 // pred_check
          %p512 = pneg %p137
        $region62: #{feed_forward.1} parent=59 // pred_check_branch
          %514 = sbr.rel (%p512) target = $region64
        $region63: #{feed_forward.1} parent=59 // pred_region
          %s515 = sand.u32 %s122, 1
          %s516 = scalar_lea.sflag [#allocation5], %s515
          %s517 = sand.u32 %s122, 1
          %s518 = smul.addr %s517, 8
          %s519 = scalar_lea.vmem [#allocation9], %s518
          %520 = dma.done %s516, 128
        $region64: #{feed_forward.1} parent=59 // pred_fallthru
          _
      $region60: #{feed_forward.1} parent=5 // pred_fallthru
        _
    $region6: #{feed_forward.1} parent=1 // loop_footer
      %s22 = sadd.s32 1, %s18
    $region7: #{feed_forward.1} parent=1 // loop_footer_branch
      %17 = sbr.rel target = $region3
    $region8: #{feed_forward.1} parent=1 // loop_exit
      _
    %521 = vsyncpa [#allocation4], 1
    %s522 = scalar_lea.sflag [#allocation4], 1
    %523 = vsyncpa %s522, 1
    %524 = vsyncpa [#allocation7], 1
    %s525 = scalar_lea.sflag [#allocation7], 1
    %526 = vsyncpa %s525, 1
    %527 = vsyncpa [#allocation5], 1
    %s528 = scalar_lea.sflag [#allocation5], 1
    %529 = vsyncpa %s528, 1

</llo_original>
